<compile_context>
chip_gen: v7x
topology: tpu7x:2x2x1
jax: 0.10.0
libtpu: 0.0.40
codegen_flags: <defaults>
</compile_context>

<pallas_src>
import functools

import jax
import jax.numpy as jnp
from jax.experimental import pallas as pl
from jax.experimental.pallas import tpu as pltpu

_LANES = 128
_BLOCK_BYTES = 8 << 20        # ~8 MiB payload per block, dtype-independent target
_VMEM_LIMIT_BYTES = 48 << 20  # 2x(in+out) double buffers + internal scratch headroom


def _first_sine_kernel(x_ref, o_ref, *, w0):
    # Pure VPU/EUP elementwise op; compute in f32, store in the output dtype.
    # TODO(synk): if v7x bundle dumps show this VALU-bound (3.2 TB/s HBM allows
    # only ~10 VALU ops/elem), replace jnp.sin with a bounded-domain
    # range-reduction + short polynomial exploiting the small |w0*x| SIREN range.
    x = x_ref[...].astype(jnp.float32)
    o_ref[...] = jnp.sin(w0 * x).astype(o_ref.dtype)


def _dimension_semantics():
    # Only CORE_PARALLEL actually shards grid steps across v7x's 2 TensorCores;
    # plain "parallel" vs "arbitrary" does not change codegen. Keep PARALLEL on
    # single-TC v5e/v6e where CORE_PARALLEL buys nothing.
    try:
        kind = jax.devices()[0].device_kind.lower()
    except Exception:
        kind = ""
    if "v7" in kind:
        return (pltpu.CORE_PARALLEL,)
    return (pltpu.PARALLEL,)


def first_sine(x: jax.Array, w0: float = 20.0, *, block_bytes: int = _BLOCK_BYTES) -> jax.Array:
    """Computes sin(w0 * x) elementwise with a Pallas TPU kernel.

    Flattens the input (any shape) to a lane-dense (rows, 128) slab and streams
    it through VMEM in ~block_bytes-sized tiles. Falls back to plain XLA when
    the element count is not a multiple of 128 or is too small for one packed
    (sub, 128) tile.
    """
    orig_shape = x.shape
    orig_dtype = x.dtype
    n = x.size

    itemsize = jnp.dtype(orig_dtype).itemsize
    # Sublane packing multiple per dtype (f32: 8, bf16/f16: 16, 8-bit: 32).
    sub = {1: 32, 2: 16}.get(itemsize, 8)

    # Fallback for ragged / tiny sizes: elementwise XLA is already optimal and
    # avoids any padding pass in HBM.
    if n == 0 or n % _LANES != 0 or n < _LANES * sub:
        y = jnp.sin(jnp.float32(w0) * x.astype(jnp.float32))
        return y.astype(orig_dtype)

    rows = n // _LANES
    x2d = x.reshape(rows, _LANES)  # row-major flatten -> free reshape, no copy pass

    # Dtype-scaled row budget so every block carries ~block_bytes of payload.
    max_rows = max(sub, (block_bytes // (_LANES * itemsize)) // sub * sub)

    if rows <= max_rows:
        # Single block covering the full row extent (always a legal block shape).
        tr = rows
    else:
        # Balance the grid: pick tr so blocks are (nearly) equal-sized and the
        # masked partial tail block is as close to full as possible.
        nblk = pl.cdiv(rows, max_rows)
        tr = min(max_rows, pl.cdiv(pl.cdiv(rows, nblk), sub) * sub)

    grid = (pl.cdiv(rows, tr),)  # any partial last block is masked by Pallas

    kernel = functools.partial(_first_sine_kernel, w0=float(w0))

    out2d = pl.pallas_call(
        kernel,
        out_shape=jax.ShapeDtypeStruct((rows, _LANES), orig_dtype),
        grid_spec=pl.GridSpec(
            grid=grid,
            in_specs=[pl.BlockSpec((tr, _LANES), lambda i: (i, 0))],
            out_specs=pl.BlockSpec((tr, _LANES), lambda i: (i, 0)),
        ),
        compiler_params=pltpu.CompilerParams(
            dimension_semantics=_dimension_semantics(),
            vmem_limit_bytes=_VMEM_LIMIT_BYTES,
        ),
    )(x2d)

    return out2d.reshape(orig_shape)


if __name__ == "__main__":
    key = jax.random.PRNGKey(0)
    w0 = 20.0

    # Small NCHW input consistent with a conv-style SIREN pipeline.
    x = jax.random.normal(key, (2, 4, 16, 16), dtype=jnp.float32)
    y = jax.block_until_ready(first_sine(x, w0))
    y_ref = jnp.sin(w0 * x)
    assert y.shape == x.shape and y.dtype == x.dtype
    assert jnp.allclose(y, y_ref, atol=1e-5, rtol=1e-5)

    # Multi-block path with grid rebalancing: 2*3*16*16 = 1536 elems = 12 rows
    # of 128; block_bytes=4096 -> max_rows=8 -> 2 blocks (8 + masked 4-row tail).
    x2 = jax.random.normal(jax.random.PRNGKey(1), (2, 3, 16, 16), dtype=jnp.float32)
    y2 = jax.block_until_ready(first_sine(x2, w0, block_bytes=4096))
    assert jnp.allclose(y2, jnp.sin(w0 * x2), atol=1e-5, rtol=1e-5)

    # bf16 path: dtype-scaled rows + f32 compute inside the kernel.
    x3 = jax.random.normal(jax.random.PRNGKey(2), (2, 4, 16, 16), dtype=jnp.bfloat16)
    y3 = jax.block_until_ready(first_sine(x3, w0))
    y3_ref = jnp.sin(w0 * x3.astype(jnp.float32)).astype(jnp.bfloat16)
    assert y3.dtype == jnp.bfloat16
    assert jnp.allclose(y3.astype(jnp.float32), y3_ref.astype(jnp.float32), atol=2e-2, rtol=2e-2)

    print("KERNEL_OK")
</pallas_src>

<mosaic_0001>
module attributes {stable_mosaic.version = 11 : i64} {
  func.func @_first_sine_kernel(%arg0: i32, %arg1: memref<16x128xf32, #tpu.memory_space<vmem>>, %arg2: memref<16x128xf32, #tpu.memory_space<vmem>>) attributes {dimension_semantics = [#tpu.dimension_semantics<parallel>], iteration_bounds = array<i64: 1>, scalar_prefetch = 0 : i64, scratch_operands = 0 : i64, tpu.core_type = #tpu.core_type<tc>, window_params = [{transform_indices = @transform_0, window_bounds = array<i64: 16, 128>}, {transform_indices = @transform_1, window_bounds = array<i64: 16, 128>}]} {
    %c0 = arith.constant 0 : index
    %c0_0 = arith.constant 0 : index
    %0 = vector.load %arg1[%c0, %c0_0] : memref<16x128xf32, #tpu.memory_space<vmem>>, vector<16x128xf32>
    %cst = arith.constant 2.000000e+01 : f32
    %1 = vector.broadcast %cst : f32 to vector<16x128xf32>
    %2 = arith.mulf %1, %0 : vector<16x128xf32>
    %3 = math.sin %2 : vector<16x128xf32>
    %c0_1 = arith.constant 0 : index
    %c0_2 = arith.constant 0 : index
    %4 = vector.load %arg2[%c0_1, %c0_2] : memref<16x128xf32, #tpu.memory_space<vmem>>, vector<16x128xf32>
    tpu.vector_store %arg2[%c0_1, %c0_2], %3 {strides = array<i32>} : memref<16x128xf32, #tpu.memory_space<vmem>>, vector<16x128xf32>,
    return
  }
  func.func @transform_0(%arg0: i32) -> (i32, i32) {
    %c0_i32 = arith.constant 0 : i32
    %c0_i32_0 = arith.constant 0 : i32
    return %arg0, %c0_i32 : i32, i32
  }
  func.func @transform_1(%arg0: i32) -> (i32, i32) {
    %c0_i32 = arith.constant 0 : i32
    %c0_i32_0 = arith.constant 0 : i32
    return %arg0, %c0_i32 : i32, i32
  }
}

</mosaic_0001>

<llo_original>
// kernel: tpu_custom_call.1
$region0: #{tpu_custom_call.1}
  #allocation0 [shape = 'u32[]', space=smem, size = 0x4, offset = 0x4, fixed_abs, tag = 'smem constant byte address 0x4 - core index']
  #allocation1 [shape = 'u32[144,128]{1,0:T(1,128)}', space=vmem, size = 0x12000, scoped, tag = 'internal scratch']
  %s0 = inlined_call_operand.hbm [shape: f32[16,128], index: 0, kind: input, shape index: {}]
  %s1 = inlined_call_operand.hbm [shape: f32[16,128], index: 1, kind: output, shape index: {}]
  %s2 = sld [smem:[#allocation0]]
  $region18: #{tpu_custom_call.1} parent=0
    _
  %s4 = ssub.s32 1, %s2
  %s5 = scalar_select 0, %s4, %s2
  $region1: #{tpu_custom_call.1} parent=0
    #allocation2 [shape = 'u8[8192]{0}', space=vmem, size = 0x2000, scoped, tag = 'input window, operand 0, single buffered']
    #allocation3 [shape = 's32[1]{0}', space=sflag, size = 0x4, scoped, tag = 'scoped memory for tpu_custom_call.1']
    #allocation4 [shape = 's32[1]{0}', space=sflag, size = 0x4, scoped, tag = 'scoped memory for tpu_custom_call.1']
    #allocation5 [shape = 'u8[8192]{0}', space=vmem, size = 0x2000, scoped, tag = 'output window, operand 0, single buffered']
    %6 = vsyncpa [#allocation3], 0
    %7 = vsyncpa [#allocation4], 0
    // Predicated region
    $region2: #{tpu_custom_call.1} parent=1 // pred_check
      _
    $region3: #{tpu_custom_call.1} parent=1 // pred_check_branch
      %9 = sbr.rel (0) target = $region5
    $region4: #{tpu_custom_call.1} parent=1 // pred_region
      %s11 = ssub.s32 256, 256
      %12 = vsyncadd [#allocation3], %s11
      %s13 = sshll.u32 [#allocation2], 4
      %s14 = int_to_ptr.vmem [resolvable:$true] %s13
      %19 = dma.hbm_to_vmem [thread:$0]  %s0, 256, %s14, [#allocation3], 128, 128, 8
    $region5: #{tpu_custom_call.1} parent=1 // pred_fallthru
      _
    // Predicated region
    $region6: #{tpu_custom_call.1} parent=1 // pred_check
      _
    $region7: #{tpu_custom_call.1} parent=1 // pred_check_branch
      %21 = sbr.rel (0) target = $region9
    $region8: #{tpu_custom_call.1} parent=1 // pred_region
      %22 = dma.done [#allocation3], 256
    $region9: #{tpu_custom_call.1} parent=1 // pred_fallthru
      _
    %v23 = vld [vmem:[#allocation2] sm:$0xff]
    %v24 = vld [vmem:[#allocation2 + $0x8] sm:$0xff]
    %v25 = vmul.f32 %v23, 20.0
    %v26 = vmul.f32 %v24, 20.0
    %v27 = vand.u32 2147483647, %v25
    %vm28 = vcmp.le.f32.partialorder %v27, 0.7853982
    %vm29 = vcmp.lt.s32.totalorder %v25, 0
    %v30 = vand.u32 %v25, 2139095040
    %v31 = vshrl.u32 %v30, 23
    %v32 = vsub.s32 %v31, 127
    %v33 = vand.u32 2147483647, %v25
    %v34 = vand.u32 %v33, 8388607
    %v35 = vor.u32 %v34, 8388608
    %v36 = vsub.s32 0, %v35
    %v37 = vadd.s32 %v32, 1
    %vm38 = vcmp.gt.s32.totalorder %v37, 0
    %v39 = vsel %vm38, %v37, 0
    %v40 = vshrl.u32 %v39, 5
    %v41 = vand.u32 %v39, 31
    %v42 = vsub.s32 32, %v41
    %v43 = vshrl.u32 683565275, %v42
    %v44 = vshll.u32 683565275, %v41
    %v45 = vshrl.u32 2475754826, %v42
    %v46 = vor.u32 %v44, %v45
    %v47 = vshll.u32 2475754826, %v41
    %v48 = vshrl.u32 2131351028, %v42
    %v49 = vor.u32 %v47, %v48
    %v50 = vshll.u32 2131351028, %v41
    %v51 = vshrl.u32 2102212464, %v42
    %v52 = vor.u32 %v50, %v51
    %v53 = vshll.u32 2102212464, %v41
    %v54 = vshrl.u32 920167782, %v42
    %v55 = vor.u32 %v53, %v54
    %v56 = vshll.u32 920167782, %v41
    %v57 = vshrl.u32 1326507024, %v42
    %v58 = vor.u32 %v56, %v57
    %vm59 = vcmp.lt.s32.totalorder %v40, 1
    %vm60 = vcmp.lt.s32.totalorder %v40, 2
    %vm61 = vcmp.lt.s32.totalorder %v40, 3
    %vm62 = vcmp.lt.s32.totalorder %v40, 4
    %v63 = vsel %vm59, %v43, %v46
    %v64 = vsel %vm62, %v52, 2102212464
    %v65 = vsel %vm61, %v49, %v64
    %v66 = vsel %vm60, %v63, %v65
    %v67 = vsel %vm59, %v46, %v49
    %v68 = vsel %vm62, %v55, 920167782
    %v69 = vsel %vm61, %v52, %v68
    %v70 = vsel %vm60, %v67, %v69
    %v71 = vsel %vm59, %v49, %v52
    %v72 = vsel %vm62, %v58, 1326507024
    %v73 = vsel %vm61, %v55, %v72
    %v74 = vsel %vm60, %v71, %v73
    %v75 = vshll.u32 %v35, 8
    %v76 = vmul.u32.u64.compose %v75, %v74
    %v77 = vextract.low.u32 %v76
    %v78 = vextract.high.u32 %v76
    %v79 = vmul.u32.u64.compose %v75, %v70
    %v80 = vextract.low.u32 %v79
    %v81 = vextract.high.u32 %v79
    %v82 = vmul.u32 %v75, %v66
    %v83 = vadd.s32 %v78, %v80
    %vm84 = vc.u32 %v78, %v80
    %v85 = vadd.s32 %v81, 1
    %v86 = vsel %vm84, %v85, %v81
    %v87 = vadd.s32 %v82, %v86
    %v88 = vadd.s32 %v87, 536870912
    %v89 = vshrl.u32 %v88, 30
    %v90 = vshll.u32 %v89, 30
    %v91 = vsub.s32 %v87, %v90
    %vm92 = vcmp.lt.s32.totalorder %v91, 0
    %v93 = vsub.s32 0, %v91
    %v94 = vsel %vm92, %v93, %v91
    %v95 = vclz %v94
    %v96 = vsub.s32 %v95, 2
    %vm97 = vcmp.gt.s32.totalorder 0, %v96
    %v98 = vsel %vm97, 0, %v96
    %v99 = vsub.s32 32, %v98
    %v100 = vshll.u32 %v91, %v98
    %v101 = vshrl.u32 %v83, %v99
    %v102 = vor.u32 %v100, %v101
    %v103 = vsub.s32 4294967266, %v98
    %v104 = vadd.s32 %v103, 127
    %v105 = vshll.u32 %v104, 23
    %v106 = vor.u32 4788187, %v105
    %v107 = vand.u32 2147483647, %v106
    %v109 = vcvt.s32.f32 %v102
    %v110 = vmul.f32 %v109, %v107
    %v111 = vxor.u32 %v110, 2147483648
    %v112 = vsel %vm29, %v111, %v110
    %v113 = vsub.s32 4, %v89
    %v114 = vsel %vm29, %v113, %v89
    %v115 = vsel %vm28, %v25, %v112
    %v116 = vsel %vm28, 0, %v114
    %v117 = vcosq.f32.pop %v115
    %v118 = vsinq.f32.pop %v115
    %vm119 = vweird.f32 %v25
    %v120 = vadd.s32 %v116, 3
    %v121 = vand.u32 %v120, 3
    %vm122 = vcmp.lt.s32.totalorder %v121, 2
    %vm123 = vcmp.eq.s32.totalorder %v121, 0
    %v124 = vxor.u32 %v118, 2147483648
    %v125 = vsel %vm123, %v117, %v124
    %vm126 = vcmp.eq.s32.totalorder %v121, 2
    %v127 = vxor.u32 %v117, 2147483648
    %v128 = vsel %vm126, %v127, %v118
    %v129 = vsel %vm122, %v125, %v128
    %v130 = vsel %vm119, nan, %v129
    %v131 = vand.u32 2147483647, %v26
    %vm132 = vcmp.le.f32.partialorder %v131, 0.7853982
    %vm133 = vcmp.lt.s32.totalorder %v26, 0
    %v134 = vand.u32 %v26, 2139095040
    %v135 = vshrl.u32 %v134, 23
    %v136 = vsub.s32 %v135, 127
    %v137 = vand.u32 2147483647, %v26
    %v138 = vand.u32 %v137, 8388607
    %v139 = vor.u32 %v138, 8388608
    %v140 = vsub.s32 0, %v139
    %v141 = vadd.s32 %v136, 1
    %vm142 = vcmp.gt.s32.totalorder %v141, 0
    %v143 = vsel %vm142, %v141, 0
    %v144 = vshrl.u32 %v143, 5
    %v145 = vand.u32 %v143, 31
    %v146 = vsub.s32 32, %v145
    %v147 = vshrl.u32 683565275, %v146
    %v148 = vshll.u32 683565275, %v145
    %v149 = vshrl.u32 2475754826, %v146
    %v150 = vor.u32 %v148, %v149
    %v151 = vshll.u32 2475754826, %v145
    %v152 = vshrl.u32 2131351028, %v146
    %v153 = vor.u32 %v151, %v152
    %v154 = vshll.u32 2131351028, %v145
    %v155 = vshrl.u32 2102212464, %v146
    %v156 = vor.u32 %v154, %v155
    %v157 = vshll.u32 2102212464, %v145
    %v158 = vshrl.u32 920167782, %v146
    %v159 = vor.u32 %v157, %v158
    %v160 = vshll.u32 920167782, %v145
    %v161 = vshrl.u32 1326507024, %v146
    %v162 = vor.u32 %v160, %v161
    %vm163 = vcmp.lt.s32.totalorder %v144, 1
    %vm164 = vcmp.lt.s32.totalorder %v144, 2
    %vm165 = vcmp.lt.s32.totalorder %v144, 3
    %vm166 = vcmp.lt.s32.totalorder %v144, 4
    %v167 = vsel %vm163, %v147, %v150
    %v168 = vsel %vm166, %v156, 2102212464
    %v169 = vsel %vm165, %v153, %v168
    %v170 = vsel %vm164, %v167, %v169
    %v171 = vsel %vm163, %v150, %v153
    %v172 = vsel %vm166, %v159, 920167782
    %v173 = vsel %vm165, %v156, %v172
    %v174 = vsel %vm164, %v171, %v173
    %v175 = vsel %vm163, %v153, %v156
    %v176 = vsel %vm166, %v162, 1326507024
    %v177 = vsel %vm165, %v159, %v176
    %v178 = vsel %vm164, %v175, %v177
    %v179 = vshll.u32 %v139, 8
    %v180 = vmul.u32.u64.compose %v179, %v178
    %v181 = vextract.low.u32 %v180
    %v182 = vextract.high.u32 %v180
    %v183 = vmul.u32.u64.compose %v179, %v174
    %v184 = vextract.low.u32 %v183
    %v185 = vextract.high.u32 %v183
    %v186 = vmul.u32 %v179, %v170
    %v187 = vadd.s32 %v182, %v184
    %vm188 = vc.u32 %v182, %v184
    %v189 = vadd.s32 %v185, 1
    %v190 = vsel %vm188, %v189, %v185
    %v191 = vadd.s32 %v186, %v190
    %v192 = vadd.s32 %v191, 536870912
    %v193 = vshrl.u32 %v192, 30
    %v194 = vshll.u32 %v193, 30
    %v195 = vsub.s32 %v191, %v194
    %vm196 = vcmp.lt.s32.totalorder %v195, 0
    %v197 = vsub.s32 0, %v195
    %v198 = vsel %vm196, %v197, %v195
    %v199 = vclz %v198
    %v200 = vsub.s32 %v199, 2
    %vm201 = vcmp.gt.s32.totalorder 0, %v200
    %v202 = vsel %vm201, 0, %v200
    %v203 = vsub.s32 32, %v202
    %v204 = vshll.u32 %v195, %v202
    %v205 = vshrl.u32 %v187, %v203
    %v206 = vor.u32 %v204, %v205
    %v207 = vsub.s32 4294967266, %v202
    %v208 = vadd.s32 %v207, 127
    %v209 = vshll.u32 %v208, 23
    %v210 = vor.u32 4788187, %v209
    %v211 = vand.u32 2147483647, %v210
    %v213 = vcvt.s32.f32 %v206
    %v214 = vmul.f32 %v213, %v211
    %v215 = vxor.u32 %v214, 2147483648
    %v216 = vsel %vm133, %v215, %v214
    %v217 = vsub.s32 4, %v193
    %v218 = vsel %vm133, %v217, %v193
    %v219 = vsel %vm132, %v26, %v216
    %v220 = vsel %vm132, 0, %v218
    %v221 = vcosq.f32.pop %v219
    %v222 = vsinq.f32.pop %v219
    %vm223 = vweird.f32 %v26
    %v224 = vadd.s32 %v220, 3
    %v225 = vand.u32 %v224, 3
    %vm226 = vcmp.lt.s32.totalorder %v225, 2
    %vm227 = vcmp.eq.s32.totalorder %v225, 0
    %v228 = vxor.u32 %v222, 2147483648
    %v229 = vsel %vm227, %v221, %v228
    %vm230 = vcmp.eq.s32.totalorder %v225, 2
    %v231 = vxor.u32 %v221, 2147483648
    %v232 = vsel %vm230, %v231, %v222
    %v233 = vsel %vm226, %v229, %v232
    %v234 = vsel %vm223, nan, %v233
    %235 = vst [vmem:[#allocation5] sm:$0xff] %v130
    %236 = vst [vmem:[#allocation5 + $0x8] sm:$0xff] %v234
    // Predicated region
    $region10: #{tpu_custom_call.1} parent=1 // pred_check
      _
    $region11: #{tpu_custom_call.1} parent=1 // pred_check_branch
      %238 = sbr.rel (0) target = $region13
    $region12: #{tpu_custom_call.1} parent=1 // pred_region
      %s240 = ssub.s32 256, 256
      %241 = vsyncadd [#allocation4], %s240
      %s242 = sshll.u32 [#allocation5], 4
      %s243 = int_to_ptr.vmem [resolvable:$true] %s242
      %248 = dma.vmem_to_hbm [thread:$0]  %s243, 256, %s1, [#allocation4], 128, 128, 8
    $region13: #{tpu_custom_call.1} parent=1 // pred_fallthru
      _
    // Predicated region
    $region14: #{tpu_custom_call.1} parent=1 // pred_check
      _
    $region15: #{tpu_custom_call.1} parent=1 // pred_check_branch
      %250 = sbr.rel (0) target = $region17
    $region16: #{tpu_custom_call.1} parent=1 // pred_region
      %251 = dma.done [#allocation4], 256
    $region17: #{tpu_custom_call.1} parent=1 // pred_fallthru
      _
    %252 = vsyncpa [#allocation3], 1
    %253 = vsyncpa [#allocation4], 1

</llo_original>
